<compile_context>
chip_gen: v7x
topology: tpu7x:2x2x1
jax: 0.10.0
libtpu: 0.0.40
codegen_flags: <defaults>
</compile_context>

<pallas_src>
import functools

import jax
import jax.numpy as jnp
from jax.experimental import pallas as pl
from jax.experimental.pallas import tpu as pltpu

NEG_SLOPE = 0.2  # nn.LeakyReLU(negative_slope=0.2)


def _gat_dst_tile_kernel(z_ref, s_src_ref, s_dst_ref, adj_ref, out_ref, *,
                         heads, d_out, approx_recip):
    # z     [N, H*D]      resident: per-head projected features (src side)
    # s_src [H, N]        resident: a_src_h . z_h[src]  (rows -> no transpose)
    # s_dst [T, H]        tile:     a_dst_h . z_h[dst]
    # adj   [T, N] int8   tile:     adj[dst, src] = 1 iff edge src -> dst
    # out   [T, H*D]      tile:     concatenated head outputs for these dst rows
    z = z_ref[...]
    s_src = s_src_ref[...]
    s_dst = s_dst_ref[...]
    # int8 -> f32 unpack once per tile; mask only feeds the VPU select below.
    edge_mask = adj_ref[...].astype(jnp.float32) > 0.0                 # (T, N)

    for hd in range(heads):  # static unroll over heads
        # e[dst, src] = LeakyReLU(a_src . z_src + a_dst . z_dst)
        e = s_dst[:, hd:hd + 1] + s_src[hd:hd + 1, :]                  # (T, N)
        e = jnp.where(e >= 0, e, NEG_SLOPE * e)                        # LeakyReLU
        # Mask non-edges; self-loops guarantee every row has >= 1 finite entry
        # (masked-max form kept for numerical safety with unbounded logits).
        e = jnp.where(edge_mask, e, -jnp.inf)

        # Unnormalized softmax over incoming edges (src axis).
        m = jnp.max(e, axis=-1, keepdims=True)
        p = jnp.exp(e - m)
        denom = jnp.sum(p, axis=-1, keepdims=True)                     # (T, 1)

        # h_dst = (sum_src p * z_src) / denom  -- division deferred past matmul
        zh = z[:, hd * d_out:(hd + 1) * d_out]                         # (N, D)
        oh = jnp.dot(p.astype(z.dtype), zh,
                     preferred_element_type=jnp.float32)               # (T, D)
        if approx_recip:
            inv = pl.reciprocal(denom, approx=True)                    # EUP slot
        else:
            inv = 1.0 / denom                                          # exact path
        # merge='cat': direct store of this head's slice of the out tile.
        out_ref[:, hd * d_out:(hd + 1) * d_out] = (oh * inv).astype(out_ref.dtype)


def multi_head_gat(h, W, A, adj, *, tile_dst=None, use_bf16=False,
                   approx_recip=False):
    """h: [N, F]; W: [H, F, D]; A: [H, 1, 2D]; adj: [N, N] -> [N, H*D]."""
    H, F, D = W.shape
    N = h.shape[0]
    HD = H * D

    # --- wrapper-side prep (one well-shaped matmul + tiny einsums) ----------
    compute_dtype = jnp.bfloat16 if use_bf16 else jnp.float32
    # Fuse all per-head fc weights into one [F, H*D] matrix (head-major lanes):
    # z[:, h*D:(h+1)*D] == h @ W_h
    w_cat = jnp.transpose(W, (1, 0, 2)).reshape(F, HD)
    z = jnp.dot(h.astype(compute_dtype), w_cat.astype(compute_dtype),
                preferred_element_type=jnp.float32)                    # (N, H*D)
    # Per-node attention logits for all heads (O(N*H*D), done once):
    a_src = A[:, 0, :D]                                                # (H, D)
    a_dst = A[:, 0, D:]                                                # (H, D)
    z_nhd = z.reshape(N, H, D)
    s_src = jnp.einsum('nhd,hd->hn', z_nhd, a_src)                     # (H, N)
    s_dst = jnp.einsum('nhd,hd->nh', z_nhd, a_dst)                     # (N, H)
    # adj only feeds a compare/select -> int8 stream (4x less HBM/VMEM).
    adj_i8 = (adj > 0).astype(jnp.int8)
    z_in = z.astype(compute_dtype)

    # --- dst tiling ---------------------------------------------------------
    if tile_dst is None:
        tile_dst = min(N, 256)   # fits v7x's 64 MiB VMEM budget up to large N
    tile_dst = min(tile_dst, N)
    assert N % tile_dst == 0, "N must be divisible by tile_dst"
    # int8 adj packs 32 rows per sublane group; keep tiles 32-row aligned
    # (or equal to N) so the adj BlockSpec stays unmasked.
    assert tile_dst == N or tile_dst % 32 == 0, \
        "tile_dst must be a multiple of 32 (int8 sublane packing) or equal N"
    grid = (N // tile_dst,)

    kernel = functools.partial(_gat_dst_tile_kernel, heads=H, d_out=D,
                               approx_recip=approx_recip)
    out = pl.pallas_call(
        kernel,
        out_shape=jax.ShapeDtypeStruct((N, HD), jnp.float32),
        grid_spec=pltpu.PrefetchScalarGridSpec(
            num_scalar_prefetch=0,
            grid=grid,
            in_specs=[
                pl.BlockSpec((N, HD), lambda i: (0, 0)),        # z      (resident)
                pl.BlockSpec((H, N), lambda i: (0, 0)),         # s_src  (resident)
                pl.BlockSpec((tile_dst, H), lambda i: (i, 0)),  # s_dst  (dst tile)
                pl.BlockSpec((tile_dst, N), lambda i: (i, 0)),  # adj    (dst tile)
            ],
            out_specs=pl.BlockSpec((tile_dst, HD), lambda i: (i, 0)),
        ),
        # dst rows are independent -> "parallel" shards the grid across v7x's
        # two TensorCores (no effect on single-TC v5e/v6e).
        # TODO(synk): for production N, raise vmem_limit_bytes here and bump
        #             tile_dst (512-1024 rows on v6e, <=256 on v7x).
        compiler_params=pltpu.CompilerParams(
            dimension_semantics=("parallel",),
        ),
    )(z_in, s_src, s_dst, adj_i8)
    return out


def multi_head_gat_ref(h, W, A, adj):
    """Pure-JAX reference with identical math (for correctness check)."""
    outs = []
    D = W.shape[2]
    for hd in range(W.shape[0]):
        z = h @ W[hd]
        a = A[hd, 0]
        s_src = z @ a[:D]
        s_dst = z @ a[D:]
        e = s_dst[:, None] + s_src[None, :]
        e = jnp.where(e >= 0, e, NEG_SLOPE * e)
        e = jnp.where(adj > 0, e, -jnp.inf)
        alpha = jax.nn.softmax(e, axis=-1)
        outs.append(alpha @ z)
    return jnp.concatenate(outs, axis=1)


if __name__ == "__main__":
    N, IN_DIM, OUT_DIM, HEADS = 128, 16, 16, 4
    TILE_DST = 32   # grid of 4 dst tiles -> exercises the pipelined grid

    key = jax.random.PRNGKey(0)
    k_h, k_w, k_a, k_e = jax.random.split(key, 4)

    # node features
    h = jax.random.normal(k_h, (N, IN_DIM), dtype=jnp.float32)

    # deterministic parameters (shapes from nn.Linear in __init__):
    #   fc.weight:             (out_feats, in_feats) -> stored transposed as [F, D]
    #   attention_func.weight: (1, 2*out_feats)      -> stored as [1, 2D]
    W = jax.random.normal(k_w, (HEADS, IN_DIM, OUT_DIM), dtype=jnp.float32) * 0.1
    A = jax.random.normal(k_a, (HEADS, 1, 2 * OUT_DIM), dtype=jnp.float32) * 0.1

    # deterministic small graph: self-loops + ring + a few random extra edges
    adj = jnp.eye(N, dtype=jnp.float32)                          # self-loops
    ring_src = jnp.arange(N)
    ring_dst = (jnp.arange(N) + 1) % N
    adj = adj.at[ring_dst, ring_src].set(1.0)                    # ring edges
    extra = jax.random.randint(k_e, (2, 3 * N), 0, N)
    adj = adj.at[extra[1], extra[0]].set(1.0)                    # random extras
    # every softmax row must be non-empty (guaranteed by the self-loops)
    assert bool(jnp.all(adj.sum(axis=1) > 0))

    out = multi_head_gat(h, W, A, adj, tile_dst=TILE_DST)
    out = jax.block_until_ready(out)

    ref = multi_head_gat_ref(h, W, A, adj)
    assert out.shape == (N, HEADS * OUT_DIM)
    assert jnp.allclose(out, ref, atol=1e-5, rtol=1e-5)

    print("KERNEL_OK")
</pallas_src>

<mosaic_0001>
module attributes {stable_mosaic.version = 11 : i64} {
  func.func @_gat_dst_tile_kernel(%arg0: i32, %arg1: memref<128x64xf32, #tpu.memory_space<vmem>>, %arg2: memref<4x128xf32, #tpu.memory_space<vmem>>, %arg3: memref<32x4xf32, #tpu.memory_space<vmem>>, %arg4: memref<32x128xi8, #tpu.memory_space<vmem>>, %arg5: memref<32x64xf32, #tpu.memory_space<vmem>>) attributes {dimension_semantics = [#tpu.dimension_semantics<parallel>], iteration_bounds = array<i64: 4>, scalar_prefetch = 0 : i64, scratch_operands = 0 : i64, tpu.core_type = #tpu.core_type<tc>, window_params = [{pipeline_mode = #tpu.pipeline_mode<synchronous>, transform_indices = @transform_0, window_bounds = array<i64: 128, 64>}, {pipeline_mode = #tpu.pipeline_mode<synchronous>, transform_indices = @transform_1, window_bounds = array<i64: 4, 128>}, {transform_indices = @transform_2, window_bounds = array<i64: 32, 4>}, {transform_indices = @transform_3, window_bounds = array<i64: 32, 128>}, {transform_indices = @transform_4, window_bounds = array<i64: 32, 64>}]} {
    %c0 = arith.constant 0 : index
    %c0_0 = arith.constant 0 : index
    %0 = vector.load %arg1[%c0, %c0_0] : memref<128x64xf32, #tpu.memory_space<vmem>>, vector<128x64xf32>
    %c0_1 = arith.constant 0 : index
    %c0_2 = arith.constant 0 : index
    %1 = vector.load %arg2[%c0_1, %c0_2] : memref<4x128xf32, #tpu.memory_space<vmem>>, vector<4x128xf32>
    %c0_3 = arith.constant 0 : index
    %c0_4 = arith.constant 0 : index
    %2 = vector.load %arg3[%c0_3, %c0_4] : memref<32x4xf32, #tpu.memory_space<vmem>>, vector<32x4xf32>
    %c0_5 = arith.constant 0 : index
    %c0_6 = arith.constant 0 : index
    %3 = vector.load %arg4[%c0_5, %c0_6] : memref<32x128xi8, #tpu.memory_space<vmem>>, vector<32x128xi8>
    %4 = arith.sitofp %3 : vector<32x128xi8> to vector<32x128xf32>
    %cst = arith.constant 0.000000e+00 : f32
    %5 = vector.broadcast %cst : f32 to vector<32x128xf32>
    %6 = arith.cmpf ogt, %4, %5 : vector<32x128xf32>
    %7 = vector.extract_strided_slice %2 {offsets = [0, 0], sizes = [32, 1], strides = [1, 1]} : vector<32x4xf32> to vector<32x1xf32>
    %8 = vector.extract_strided_slice %1 {offsets = [0, 0], sizes = [1, 128], strides = [1, 1]} : vector<4x128xf32> to vector<1x128xf32>
    %9 = vector.broadcast %7 : vector<32x1xf32> to vector<32x128xf32>
    %10 = vector.broadcast %8 : vector<1x128xf32> to vector<32x128xf32>
    %11 = arith.addf %9, %10 : vector<32x128xf32>
    %cst_7 = arith.constant 0.000000e+00 : f32
    %12 = vector.broadcast %cst_7 : f32 to vector<32x128xf32>
    %13 = arith.cmpf oge, %11, %12 : vector<32x128xf32>
    %cst_8 = arith.constant 2.000000e-01 : f32
    %14 = vector.broadcast %cst_8 : f32 to vector<32x128xf32>
    %15 = arith.mulf %14, %11 : vector<32x128xf32>
    %16 = arith.select %13, %11, %15 : vector<32x128xi1>, vector<32x128xf32>
    %cst_9 = arith.constant 0xFF800000 : f32
    %17 = vector.broadcast %cst_9 : f32 to vector<32x128xf32>
    %18 = arith.select %6, %16, %17 : vector<32x128xi1>, vector<32x128xf32>
    %cst_10 = arith.constant dense<0xFF800000> : vector<32xf32>
    %19 = vector.multi_reduction <maximumf>, %18, %cst_10 [1] : vector<32x128xf32> to vector<32xf32>
    %20 = vector.shape_cast %19 : vector<32xf32> to vector<32x1xf32>
    %21 = vector.broadcast %20 : vector<32x1xf32> to vector<32x128xf32>
    %22 = arith.subf %18, %21 : vector<32x128xf32>
    %23 = math.exp %22 : vector<32x128xf32>
    %cst_11 = arith.constant dense<0.000000e+00> : vector<32xf32>
    %24 = vector.multi_reduction <add>, %23, %cst_11 [1] : vector<32x128xf32> to vector<32xf32>
    %25 = vector.shape_cast %24 : vector<32xf32> to vector<32x1xf32>
    %26 = vector.extract_strided_slice %0 {offsets = [0, 0], sizes = [128, 16], strides = [1, 1]} : vector<128x64xf32> to vector<128x16xf32>
    %cst_12 = arith.constant dense<0.000000e+00> : vector<32x16xf32>
    %27 = tpu.matmul %23, %26, %cst_12 {dimension_numbers = #tpu.dot_dimension_numbers<[1], [0], [0], [1], [0, 0, 1, 1], [], []>} : vector<32x128xf32>, vector<128x16xf32>, vector<32x16xf32> -> vector<32x16xf32>
    %cst_13 = arith.constant 1.000000e+00 : f32
    %28 = vector.broadcast %cst_13 : f32 to vector<32x1xf32>
    %29 = arith.divf %28, %25 : vector<32x1xf32>
    %30 = vector.broadcast %29 : vector<32x1xf32> to vector<32x16xf32>
    %31 = arith.mulf %27, %30 : vector<32x16xf32>
    %c0_14 = arith.constant 0 : index
    %c0_15 = arith.constant 0 : index
    %32 = vector.load %arg5[%c0_14, %c0_15] : memref<32x64xf32, #tpu.memory_space<vmem>>, vector<32x16xf32>
    tpu.vector_store %arg5[%c0_14, %c0_15], %31 {strides = array<i32>} : memref<32x64xf32, #tpu.memory_space<vmem>>, vector<32x16xf32>,
    %33 = vector.extract_strided_slice %2 {offsets = [0, 1], sizes = [32, 1], strides = [1, 1]} : vector<32x4xf32> to vector<32x1xf32>
    %34 = vector.extract_strided_slice %1 {offsets = [1, 0], sizes = [1, 128], strides = [1, 1]} : vector<4x128xf32> to vector<1x128xf32>
    %35 = vector.broadcast %33 : vector<32x1xf32> to vector<32x128xf32>
    %36 = vector.broadcast %34 : vector<1x128xf32> to vector<32x128xf32>
    %37 = arith.addf %35, %36 : vector<32x128xf32>
    %cst_16 = arith.constant 0.000000e+00 : f32
    %38 = vector.broadcast %cst_16 : f32 to vector<32x128xf32>
    %39 = arith.cmpf oge, %37, %38 : vector<32x128xf32>
    %cst_17 = arith.constant 2.000000e-01 : f32
    %40 = vector.broadcast %cst_17 : f32 to vector<32x128xf32>
    %41 = arith.mulf %40, %37 : vector<32x128xf32>
    %42 = arith.select %39, %37, %41 : vector<32x128xi1>, vector<32x128xf32>
    %cst_18 = arith.constant 0xFF800000 : f32
    %43 = vector.broadcast %cst_18 : f32 to vector<32x128xf32>
    %44 = arith.select %6, %42, %43 : vector<32x128xi1>, vector<32x128xf32>
    %cst_19 = arith.constant dense<0xFF800000> : vector<32xf32>
    %45 = vector.multi_reduction <maximumf>, %44, %cst_19 [1] : vector<32x128xf32> to vector<32xf32>
    %46 = vector.shape_cast %45 : vector<32xf32> to vector<32x1xf32>
    %47 = vector.broadcast %46 : vector<32x1xf32> to vector<32x128xf32>
    %48 = arith.subf %44, %47 : vector<32x128xf32>
    %49 = math.exp %48 : vector<32x128xf32>
    %cst_20 = arith.constant dense<0.000000e+00> : vector<32xf32>
    %50 = vector.multi_reduction <add>, %49, %cst_20 [1] : vector<32x128xf32> to vector<32xf32>
    %51 = vector.shape_cast %50 : vector<32xf32> to vector<32x1xf32>
    %52 = vector.extract_strided_slice %0 {offsets = [0, 16], sizes = [128, 16], strides = [1, 1]} : vector<128x64xf32> to vector<128x16xf32>
    %cst_21 = arith.constant dense<0.000000e+00> : vector<32x16xf32>
    %53 = tpu.matmul %49, %52, %cst_21 {dimension_numbers = #tpu.dot_dimension_numbers<[1], [0], [0], [1], [0, 0, 1, 1], [], []>} : vector<32x128xf32>, vector<128x16xf32>, vector<32x16xf32> -> vector<32x16xf32>
    %cst_22 = arith.constant 1.000000e+00 : f32
    %54 = vector.broadcast %cst_22 : f32 to vector<32x1xf32>
    %55 = arith.divf %54, %51 : vector<32x1xf32>
    %56 = vector.broadcast %55 : vector<32x1xf32> to vector<32x16xf32>
    %57 = arith.mulf %53, %56 : vector<32x16xf32>
    %c0_23 = arith.constant 0 : index
    %c16 = arith.constant 16 : index
    %58 = vector.load %arg5[%c0_23, %c16] : memref<32x64xf32, #tpu.memory_space<vmem>>, vector<32x16xf32>
    tpu.vector_store %arg5[%c0_23, %c16], %57 {strides = array<i32>} : memref<32x64xf32, #tpu.memory_space<vmem>>, vector<32x16xf32>,
    %59 = vector.extract_strided_slice %2 {offsets = [0, 2], sizes = [32, 1], strides = [1, 1]} : vector<32x4xf32> to vector<32x1xf32>
    %60 = vector.extract_strided_slice %1 {offsets = [2, 0], sizes = [1, 128], strides = [1, 1]} : vector<4x128xf32> to vector<1x128xf32>
    %61 = vector.broadcast %59 : vector<32x1xf32> to vector<32x128xf32>
    %62 = vector.broadcast %60 : vector<1x128xf32> to vector<32x128xf32>
    %63 = arith.addf %61, %62 : vector<32x128xf32>
    %cst_24 = arith.constant 0.000000e+00 : f32
    %64 = vector.broadcast %cst_24 : f32 to vector<32x128xf32>
    %65 = arith.cmpf oge, %63, %64 : vector<32x128xf32>
    %cst_25 = arith.constant 2.000000e-01 : f32
    %66 = vector.broadcast %cst_25 : f32 to vector<32x128xf32>
    %67 = arith.mulf %66, %63 : vector<32x128xf32>
    %68 = arith.select %65, %63, %67 : vector<32x128xi1>, vector<32x128xf32>
    %cst_26 = arith.constant 0xFF800000 : f32
    %69 = vector.broadcast %cst_26 : f32 to vector<32x128xf32>
    %70 = arith.select %6, %68, %69 : vector<32x128xi1>, vector<32x128xf32>
    %cst_27 = arith.constant dense<0xFF800000> : vector<32xf32>
    %71 = vector.multi_reduction <maximumf>, %70, %cst_27 [1] : vector<32x128xf32> to vector<32xf32>
    %72 = vector.shape_cast %71 : vector<32xf32> to vector<32x1xf32>
    %73 = vector.broadcast %72 : vector<32x1xf32> to vector<32x128xf32>
    %74 = arith.subf %70, %73 : vector<32x128xf32>
    %75 = math.exp %74 : vector<32x128xf32>
    %cst_28 = arith.constant dense<0.000000e+00> : vector<32xf32>
    %76 = vector.multi_reduction <add>, %75, %cst_28 [1] : vector<32x128xf32> to vector<32xf32>
    %77 = vector.shape_cast %76 : vector<32xf32> to vector<32x1xf32>
    %78 = vector.extract_strided_slice %0 {offsets = [0, 32], sizes = [128, 16], strides = [1, 1]} : vector<128x64xf32> to vector<128x16xf32>
    %cst_29 = arith.constant dense<0.000000e+00> : vector<32x16xf32>
    %79 = tpu.matmul %75, %78, %cst_29 {dimension_numbers = #tpu.dot_dimension_numbers<[1], [0], [0], [1], [0, 0, 1, 1], [], []>} : vector<32x128xf32>, vector<128x16xf32>, vector<32x16xf32> -> vector<32x16xf32>
    %cst_30 = arith.constant 1.000000e+00 : f32
    %80 = vector.broadcast %cst_30 : f32 to vector<32x1xf32>
    %81 = arith.divf %80, %77 : vector<32x1xf32>
    %82 = vector.broadcast %81 : vector<32x1xf32> to vector<32x16xf32>
    %83 = arith.mulf %79, %82 : vector<32x16xf32>
    %c0_31 = arith.constant 0 : index
    %c32 = arith.constant 32 : index
    %84 = vector.load %arg5[%c0_31, %c32] : memref<32x64xf32, #tpu.memory_space<vmem>>, vector<32x16xf32>
    tpu.vector_store %arg5[%c0_31, %c32], %83 {strides = array<i32>} : memref<32x64xf32, #tpu.memory_space<vmem>>, vector<32x16xf32>,
    %85 = vector.extract_strided_slice %2 {offsets = [0, 3], sizes = [32, 1], strides = [1, 1]} : vector<32x4xf32> to vector<32x1xf32>
    %86 = vector.extract_strided_slice %1 {offsets = [3, 0], sizes = [1, 128], strides = [1, 1]} : vector<4x128xf32> to vector<1x128xf32>
    %87 = vector.broadcast %85 : vector<32x1xf32> to vector<32x128xf32>
    %88 = vector.broadcast %86 : vector<1x128xf32> to vector<32x128xf32>
    %89 = arith.addf %87, %88 : vector<32x128xf32>
    %cst_32 = arith.constant 0.000000e+00 : f32
    %90 = vector.broadcast %cst_32 : f32 to vector<32x128xf32>
    %91 = arith.cmpf oge, %89, %90 : vector<32x128xf32>
    %cst_33 = arith.constant 2.000000e-01 : f32
    %92 = vector.broadcast %cst_33 : f32 to vector<32x128xf32>
    %93 = arith.mulf %92, %89 : vector<32x128xf32>
    %94 = arith.select %91, %89, %93 : vector<32x128xi1>, vector<32x128xf32>
    %cst_34 = arith.constant 0xFF800000 : f32
    %95 = vector.broadcast %cst_34 : f32 to vector<32x128xf32>
    %96 = arith.select %6, %94, %95 : vector<32x128xi1>, vector<32x128xf32>
    %cst_35 = arith.constant dense<0xFF800000> : vector<32xf32>
    %97 = vector.multi_reduction <maximumf>, %96, %cst_35 [1] : vector<32x128xf32> to vector<32xf32>
    %98 = vector.shape_cast %97 : vector<32xf32> to vector<32x1xf32>
    %99 = vector.broadcast %98 : vector<32x1xf32> to vector<32x128xf32>
    %100 = arith.subf %96, %99 : vector<32x128xf32>
    %101 = math.exp %100 : vector<32x128xf32>
    %cst_36 = arith.constant dense<0.000000e+00> : vector<32xf32>
    %102 = vector.multi_reduction <add>, %101, %cst_36 [1] : vector<32x128xf32> to vector<32xf32>
    %103 = vector.shape_cast %102 : vector<32xf32> to vector<32x1xf32>
    %104 = vector.extract_strided_slice %0 {offsets = [0, 48], sizes = [128, 16], strides = [1, 1]} : vector<128x64xf32> to vector<128x16xf32>
    %cst_37 = arith.constant dense<0.000000e+00> : vector<32x16xf32>
    %105 = tpu.matmul %101, %104, %cst_37 {dimension_numbers = #tpu.dot_dimension_numbers<[1], [0], [0], [1], [0, 0, 1, 1], [], []>} : vector<32x128xf32>, vector<128x16xf32>, vector<32x16xf32> -> vector<32x16xf32>
    %cst_38 = arith.constant 1.000000e+00 : f32
    %106 = vector.broadcast %cst_38 : f32 to vector<32x1xf32>
    %107 = arith.divf %106, %103 : vector<32x1xf32>
    %108 = vector.broadcast %107 : vector<32x1xf32> to vector<32x16xf32>
    %109 = arith.mulf %105, %108 : vector<32x16xf32>
    %c0_39 = arith.constant 0 : index
    %c48 = arith.constant 48 : index
    %110 = vector.load %arg5[%c0_39, %c48] : memref<32x64xf32, #tpu.memory_space<vmem>>, vector<32x16xf32>
    tpu.vector_store %arg5[%c0_39, %c48], %109 {strides = array<i32>} : memref<32x64xf32, #tpu.memory_space<vmem>>, vector<32x16xf32>,
    return
  }
  func.func @transform_0(%arg0: i32) -> (i32, i32) {
    %c0_i32 = arith.constant 0 : i32
    %c0_i32_0 = arith.constant 0 : i32
    %c0_i32_1 = arith.constant 0 : i32
    return %c0_i32, %c0_i32_0 : i32, i32
  }
  func.func @transform_1(%arg0: i32) -> (i32, i32) {
    %c0_i32 = arith.constant 0 : i32
    %c0_i32_0 = arith.constant 0 : i32
    %c0_i32_1 = arith.constant 0 : i32
    return %c0_i32, %c0_i32_0 : i32, i32
  }
  func.func @transform_2(%arg0: i32) -> (i32, i32) {
    %c0_i32 = arith.constant 0 : i32
    %c0_i32_0 = arith.constant 0 : i32
    return %arg0, %c0_i32 : i32, i32
  }
  func.func @transform_3(%arg0: i32) -> (i32, i32) {
    %c0_i32 = arith.constant 0 : i32
    %c0_i32_0 = arith.constant 0 : i32
    return %arg0, %c0_i32 : i32, i32
  }
  func.func @transform_4(%arg0: i32) -> (i32, i32) {
    %c0_i32 = arith.constant 0 : i32
    %c0_i32_0 = arith.constant 0 : i32
    return %arg0, %c0_i32 : i32, i32
  }
}

</mosaic_0001>

<llo_original>
// kernel: tpu_custom_call.1
$region0: #{tpu_custom_call.1}
  #allocation0 [shape = 'u32[]', space=smem, size = 0x4, offset = 0x4, fixed_abs, tag = 'smem constant byte address 0x4 - core index']
  #allocation1 [shape = 'u32[144,128]{1,0:T(1,128)}', space=vmem, size = 0x12000, scoped, tag = 'internal scratch']
  %s0 = inlined_call_operand.vmem [shape: f32[128,64], index: 0, kind: input, shape index: {}]
  %s1 = inlined_call_operand.vmem [shape: f32[4,128], index: 1, kind: input, shape index: {}]
  %s2 = inlined_call_operand.vmem [shape: f32[128,4], index: 2, kind: input, shape index: {}]
  %s3 = inlined_call_operand.vmem [shape: s8[128,128], index: 3, kind: input, shape index: {}]
  %s4 = inlined_call_operand.vmem [shape: f32[128,64], index: 4, kind: output, shape index: {}]
  %s5 = sld [smem:[#allocation0]]
  $region49: #{tpu_custom_call.1} parent=0
    _
  %s7 = ssub.s32 1, %s5
  %s8 = scalar_select 0, %s7, %s5
  loop: start=0, step=1, limit=6
  $region2: #{tpu_custom_call.1} parent=0 // loop_pre_header
    _
  $region3: #{tpu_custom_call.1} parent=0 // loop_header
    %s10 = sphi 0, %s14
    %p11 = scmp.ge.s32.totalorder %s10, 6
    %s18 = sphi 0, %s18
    %s20 = sphi 0, %s18
    %s21 = sphi 0, %s20
    %s35 = sphi 0, %s21
    %s39 = sphi 0, %s39
    %s41 = sphi 0, %s39
    %s42 = sphi 0, %s41
    %s56 = sphi 0, %s42
    %s62 = sphi 0, %s64
    %s65 = sphi 0, %s62
    %s66 = sphi 0, %s65
    %s82 = sphi 0, %s66
    %s88 = sphi 0, %s90
    %s91 = sphi 0, %s88
    %s92 = sphi 0, %s91
    %s108 = sphi 0, %s92
    %s114 = sphi 0, %s116
    %s117 = sphi 0, %s114
    %s118 = sphi 0, %s117
    %s134 = sphi 0, %s118
  $region4: #{tpu_custom_call.1} parent=0 // loop_header_branch
    %13 = sbr.rel (%p11) target = $region8
  $region5: #{tpu_custom_call.1} parent=0 // loop_body
    %s15 = ssub.s32 %s10, 1
    %s16 = ssub.s32 %s10, 2
    %s17 = sadd.s32 %s10, 1
    %s19 = sadd.s32 %s18, 1
    %p22 = scmp.eq.s32.totalorder %s10, 3
    %p23 = scmp.ne.s32.totalorder %s18, %s20
    %p24 = scmp.eq.s32.totalorder %s10, 0
    %p25 = por %p23, %p24
    %p26 = scmp.ne.s32.totalorder %s18, %s20
    %p27 = scmp.eq.s32.totalorder %s15, 3
    %p28 = por %p26, %p27
    %p29 = scmp.ne.s32.totalorder %s20, %s21
    %p30 = scmp.eq.s32.totalorder %s15, 0
    %p31 = por %p29, %p30
    %p32 = scmp.ne.s32.totalorder %s20, %s21
    %p33 = scmp.eq.s32.totalorder %s16, 3
    %p34 = por %p32, %p33
    %p36 = scmp.ne.s32.totalorder %s21, %s35
    %p37 = scmp.eq.s32.totalorder %s16, 0
    %p38 = por %p36, %p37
    %s40 = sadd.s32 %s39, 1
    %p43 = scmp.eq.s32.totalorder %s10, 3
    %p44 = scmp.ne.s32.totalorder %s39, %s41
    %p45 = scmp.eq.s32.totalorder %s10, 0
    %p46 = por %p44, %p45
    %p47 = scmp.ne.s32.totalorder %s39, %s41
    %p48 = scmp.eq.s32.totalorder %s15, 3
    %p49 = por %p47, %p48
    %p50 = scmp.ne.s32.totalorder %s41, %s42
    %p51 = scmp.eq.s32.totalorder %s15, 0
    %p52 = por %p50, %p51
    %p53 = scmp.ne.s32.totalorder %s41, %s42
    %p54 = scmp.eq.s32.totalorder %s16, 3
    %p55 = por %p53, %p54
    %p57 = scmp.ne.s32.totalorder %s42, %s56
    %p58 = scmp.eq.s32.totalorder %s16, 0
    %p59 = por %p57, %p58
    %s60 = ssub.s32 %s10, %s17
    %p61 = scmp.eq.s32.totalorder %s60, 0
    %s63 = sadd.s32 %s62, 1
    %s64 = scalar_select %p61, %s62, %s63
    %p67 = pneg %p61
    %p68 = scmp.eq.s32.totalorder %s10, 3
    %p69 = por %p67, %p68
    %p70 = scmp.ne.s32.totalorder %s62, %s65
    %p71 = scmp.eq.s32.totalorder %s10, 0
    %p72 = por %p70, %p71
    %p73 = scmp.ne.s32.totalorder %s62, %s65
    %p74 = scmp.eq.s32.totalorder %s15, 3
    %p75 = por %p73, %p74
    %p76 = scmp.ne.s32.totalorder %s65, %s66
    %p77 = scmp.eq.s32.totalorder %s15, 0
    %p78 = por %p76, %p77
    %p79 = scmp.ne.s32.totalorder %s65, %s66
    %p80 = scmp.eq.s32.totalorder %s16, 3
    %p81 = por %p79, %p80
    %p83 = scmp.ne.s32.totalorder %s66, %s82
    %p84 = scmp.eq.s32.totalorder %s16, 0
    %p85 = por %p83, %p84
    %s86 = ssub.s32 %s10, %s17
    %p87 = scmp.eq.s32.totalorder %s86, 0
    %s89 = sadd.s32 %s88, 1
    %s90 = scalar_select %p87, %s88, %s89
    %p93 = pneg %p87
    %p94 = scmp.eq.s32.totalorder %s10, 3
    %p95 = por %p93, %p94
    %p96 = scmp.ne.s32.totalorder %s88, %s91
    %p97 = scmp.eq.s32.totalorder %s10, 0
    %p98 = por %p96, %p97
    %p99 = scmp.ne.s32.totalorder %s88, %s91
    %p100 = scmp.eq.s32.totalorder %s15, 3
    %p101 = por %p99, %p100
    %p102 = scmp.ne.s32.totalorder %s91, %s92
    %p103 = scmp.eq.s32.totalorder %s15, 0
    %p104 = por %p102, %p103
    %p105 = scmp.ne.s32.totalorder %s91, %s92
    %p106 = scmp.eq.s32.totalorder %s16, 3
    %p107 = por %p105, %p106
    %p109 = scmp.ne.s32.totalorder %s92, %s108
    %p110 = scmp.eq.s32.totalorder %s16, 0
    %p111 = por %p109, %p110
    %s112 = ssub.s32 %s10, %s17
    %p113 = scmp.eq.s32.totalorder %s112, 0
    %s115 = sadd.s32 %s114, 1
    %s116 = scalar_select %p113, %s114, %s115
    %p119 = pneg %p113
    %p120 = scmp.eq.s32.totalorder %s10, 3
    %p121 = por %p119, %p120
    %p122 = scmp.ne.s32.totalorder %s114, %s117
    %p123 = scmp.eq.s32.totalorder %s10, 0
    %p124 = por %p122, %p123
    %p125 = scmp.ne.s32.totalorder %s114, %s117
    %p126 = scmp.eq.s32.totalorder %s15, 3
    %p127 = por %p125, %p126
    %p128 = scmp.ne.s32.totalorder %s117, %s118
    %p129 = scmp.eq.s32.totalorder %s15, 0
    %p130 = por %p128, %p129
    %p131 = scmp.ne.s32.totalorder %s117, %s118
    %p132 = scmp.eq.s32.totalorder %s16, 3
    %p133 = por %p131, %p132
    %p135 = scmp.ne.s32.totalorder %s118, %s134
    %p136 = scmp.eq.s32.totalorder %s16, 0
    %p137 = por %p135, %p136
    %p138 = scmp.le.s32.totalorder 1, %s10
    %p139 = scmp.lt.s32.totalorder %s10, 5
    %p140 = pnand %p138, %p139
    %p141 = pneg %p140
    // Predicated region
    $region9: #{tpu_custom_call.1} parent=5 // pred_check
      _
    $region10: #{tpu_custom_call.1} parent=5 // pred_check_branch
      %143 = sbr.rel (%p140) target = $region12
    $region11: #{tpu_custom_call.1} parent=5 // pred_region
      %s144 = ssub.s32 %s10, 1
      // Predicated region
      $region13: #{tpu_custom_call.1} parent=11 // pred_check
        %p145 = pneg %p31
      $region14: #{tpu_custom_call.1} parent=11 // pred_check_branch
        %147 = sbr.rel (%p145) target = $region16
      $region15: #{tpu_custom_call.1} parent=11 // pred_region
        _
      $region16: #{tpu_custom_call.1} parent=11 // pred_fallthru
        _
      // Predicated region
      $region17: #{tpu_custom_call.1} parent=11 // pred_check
        %p148 = pneg %p52
      $region18: #{tpu_custom_call.1} parent=11 // pred_check_branch
        %150 = sbr.rel (%p148) target = $region20
      $region19: #{tpu_custom_call.1} parent=11 // pred_region
        _
      $region20: #{tpu_custom_call.1} parent=11 // pred_fallthru
        _
    $region12: #{tpu_custom_call.1} parent=5 // pred_fallthru
      _
    %p151 = scmp.lt.s32.totalorder %s10, 4
    // Predicated region
    $region21: #{tpu_custom_call.1} parent=5 // pred_check
      %p152 = pneg %p151
    $region22: #{tpu_custom_call.1} parent=5 // pred_check_branch
      %154 = sbr.rel (%p152) target = $region24
    $region23: #{tpu_custom_call.1} parent=5 // pred_region
      // Predicated region
      $region25: #{tpu_custom_call.1} parent=23 // pred_check
        %p155 = pneg %p72
      $region26: #{tpu_custom_call.1} parent=23 // pred_check_branch
        %157 = sbr.rel (%p155) target = $region28
      $region27: #{tpu_custom_call.1} parent=23 // pred_region
        %s158 = smul.u32 4, %s10
        %p159 = scmp.lt.s32.totalorder %s158, 15
        %s160 = scalar_select %p159, %s158, 15
        %s161 = smul.addr %s160, 8
        %s162 = scalar_lea.vmem %s2, %s161
        %s163 = smul.u32 4, %s10
      $region28: #{tpu_custom_call.1} parent=23 // pred_fallthru
        _
      // Predicated region
      $region29: #{tpu_custom_call.1} parent=23 // pred_check
        %p164 = pneg %p98
      $region30: #{tpu_custom_call.1} parent=23 // pred_check_branch
        %166 = sbr.rel (%p164) target = $region32
      $region31: #{tpu_custom_call.1} parent=23 // pred_region
        %p167 = scmp.lt.s32.totalorder %s10, 3
        %s168 = scalar_select %p167, %s10, 3
        %s169 = smul.addr %s168, 8
        %s170 = scalar_lea.vmem %s3, %s169
      $region32: #{tpu_custom_call.1} parent=23 // pred_fallthru
        _
    $region24: #{tpu_custom_call.1} parent=5 // pred_fallthru
      _
    %p171 = scmp.le.s32.totalorder 1, %s10
    %p172 = scmp.lt.s32.totalorder %s10, 5
    %p173 = pnand %p171, %p172
    %p174 = pneg %p173
    // Predicated region
    $region33: #{tpu_custom_call.1} parent=5 // pred_check
      _
    $region34: #{tpu_custom_call.1} parent=5 // pred_check_branch
      %176 = sbr.rel (%p173) target = $region36
    $region35: #{tpu_custom_call.1} parent=5 // pred_region
      %s177 = ssub.s32 %s10, 1
      %p178 = pneg %p31
      %p179 = pneg %p28
      %p180 = pneg %p52
      %p181 = pneg %p49
      %s182 = smul.u32 4, %s15
      %p183 = scmp.lt.s32.totalorder %s182, 15
      %s184 = scalar_select %p183, %s182, 15
      %s185 = smul.addr %s184, 8
      %s186 = scalar_lea.vmem %s2, %s185
      %p187 = pneg %p78
      %p188 = pneg %p75
      %p189 = scmp.lt.s32.totalorder %s15, 3
      %s190 = scalar_select %p189, %s15, 3
      %s191 = smul.addr %s190, 8
      %s192 = scalar_lea.vmem %s3, %s191
      %p193 = pneg %p104
      %p194 = pneg %p101
      %p195 = pneg %p130
      %p196 = pneg %p127
      %s197 = smul.u32 4, %s15
      %p198 = scmp.lt.s32.totalorder %s197, 15
      %s199 = scalar_select %p198, %s197, 15
      %s200 = smul.addr %s199, 8
      %s201 = scalar_lea.vmem %s4, %s200
      %s202 = smul.u32 4, %s15
      %p203 = scmp.lt.s32.totalorder %s202, 15
      %s204 = scalar_select %p203, %s202, 15
      %s205 = smul.addr %s204, 8
      %s206 = scalar_lea.vmem %s2, %s205
      %s207 = smul.u32 4, %s15
      %p208 = scmp.lt.s32.totalorder %s15, 3
      %s209 = scalar_select %p208, %s15, 3
      %s210 = smul.addr %s209, 8
      %s211 = scalar_lea.vmem %s3, %s210
      %s212 = smul.u32 4, %s15
      %p213 = scmp.lt.s32.totalorder %s212, 15
      %s214 = scalar_select %p213, %s212, 15
      %s215 = smul.addr %s214, 8
      %s216 = scalar_lea.vmem %s4, %s215
      %s217 = smul.u32 4, %s15
      %v218 = vld [vmem:[%s0] sm:$0xff]
      %v219 = vld [vmem:[%s0 + $0x8] sm:$0xff]
      %v220 = vld [vmem:[%s0 + $0x10] sm:$0xff]
      %v221 = vld [vmem:[%s0 + $0x18] sm:$0xff]
      %v222 = vld [vmem:[%s0 + $0x20] sm:$0xff]
      %v223 = vld [vmem:[%s0 + $0x28] sm:$0xff]
      %v224 = vld [vmem:[%s0 + $0x30] sm:$0xff]
      %v225 = vld [vmem:[%s0 + $0x38] sm:$0xff]
      %v226 = vld [vmem:[%s0 + $0x40] sm:$0xff]
      %v227 = vld [vmem:[%s0 + $0x48] sm:$0xff]
      %v228 = vld [vmem:[%s0 + $0x50] sm:$0xff]
      %v229 = vld [vmem:[%s0 + $0x58] sm:$0xff]
      %v230 = vld [vmem:[%s0 + $0x60] sm:$0xff]
      %v231 = vld [vmem:[%s0 + $0x68] sm:$0xff]
      %v232 = vld [vmem:[%s0 + $0x70] sm:$0xff]
      %v233 = vld [vmem:[%s0 + $0x78] sm:$0xff]
      %v234 = vld [vmem:[%s1] sm:$0xf]
      %v235 = vld [vmem:[%s206] sm:$0xff]
      %v236 = vld [vmem:[%s206 + $0x8] sm:$0xff]
      %v237 = vld [vmem:[%s206 + $0x10] sm:$0xff]
      %v238 = vld [vmem:[%s206 + $0x18] sm:$0xff]
      %v239 = vld [vmem:[%s211] sm:$0xff]
      %v240 = vunpack.c.0.s8 %v239
      %v241 = vunpack.c.1.s8 %v239
      %v242 = vunpack.c.2.s8 %v239
      %v243 = vunpack.c.3.s8 %v239
      %v244 = vcvt.s32.f32 %v240
      %v245 = vcvt.s32.f32 %v241
      %v246 = vcvt.s32.f32 %v242
      %v247 = vcvt.s32.f32 %v243
      %vm248 = vcmp.gt.f32.partialorder %v244, 0.0
      %vm249 = vcmp.gt.f32.partialorder %v245, 0.0
      %vm250 = vcmp.gt.f32.partialorder %v246, 0.0
      %vm251 = vcmp.gt.f32.partialorder %v247, 0.0
      %253 = vset.pattern.permute.xlu0 0
      %254 = vperm.xlu0 %253, %v235
      %v255 = vpop.permute.xlu0 %254
      %258 = vset.pattern.permute.xlu0 0
      %259 = vperm.xlu0 %258, %v236
      %v260 = vpop.permute.xlu0 %259
      %263 = vset.pattern.permute.xlu0 0
      %264 = vperm.xlu0 %263, %v237
      %v265 = vpop.permute.xlu0 %264
      %268 = vset.pattern.permute.xlu0 0
      %269 = vperm.xlu0 %268, %v238
      %v270 = vpop.permute.xlu0 %269
      %v272 = vlaneseq
      %v273 = vshrl.u32 %v272, 7
      %v274 = vsub.s32 0, %v273
      %v275 = vrot.slane %v234, %v274
      %v276 = vadd.f32 %v255, %v275
      %v277 = vadd.f32 %v260, %v275
      %v278 = vadd.f32 %v265, %v275
      %v279 = vadd.f32 %v270, %v275
      %vm280 = vcmp.ge.f32.partialorder %v276, 0.0
      %vm281 = vcmp.ge.f32.partialorder %v277, 0.0
      %vm282 = vcmp.ge.f32.partialorder %v278, 0.0
      %vm283 = vcmp.ge.f32.partialorder %v279, 0.0
      %v284 = vmul.f32 %v276, 0.2
      %v285 = vmul.f32 %v277, 0.2
      %v286 = vmul.f32 %v278, 0.2
      %v287 = vmul.f32 %v279, 0.2
      %v288 = vsel %vm280, %v276, %v284
      %v289 = vsel %vm281, %v277, %v285
      %v290 = vsel %vm282, %v278, %v286
      %v291 = vsel %vm283, %v279, %v287
      %v292 = vsel %vm248, %v288, -inf
      %v293 = vsel %vm249, %v289, -inf
      %v294 = vsel %vm250, %v290, -inf
      %v295 = vsel %vm251, %v291, -inf
      %296 = vmax.xlane.f32.xlu0 %v292
      %v297 = vpop.xlane.xlu0 %296
      %298 = vmax.xlane.f32.xlu0 %v293
      %v299 = vpop.xlane.xlu0 %298
      %300 = vmax.xlane.f32.xlu0 %v294
      %v301 = vpop.xlane.xlu0 %300
      %302 = vmax.xlane.f32.xlu0 %v295
      %v303 = vpop.xlane.xlu0 %302
      %v304 = vsub.f32 %v292, %v297
      %v305 = vsub.f32 %v293, %v299
      %v306 = vsub.f32 %v294, %v301
      %v307 = vsub.f32 %v295, %v303
      %v308 = vmul.f32 %v304, 1.442695
      %v309 = vpow.pop %v308
      %v310 = vmul.f32 %v305, 1.442695
      %v311 = vpow.pop %v310
      %v312 = vmul.f32 %v306, 1.442695
      %v313 = vpow.pop %v312
      %v314 = vmul.f32 %v307, 1.442695
      %v315 = vpow.pop %v314
      %316 = vadd.xlane.f32.xlu0 %v309
      %v317 = vpop.xlane.xlu0 %316
      %318 = vadd.xlane.f32.xlu0 %v311
      %v319 = vpop.xlane.xlu0 %318
      %320 = vadd.xlane.f32.xlu0 %v313
      %v321 = vpop.xlane.xlu0 %320
      %322 = vadd.xlane.f32.xlu0 %v315
      %v323 = vpop.xlane.xlu0 %322
      %324 = vmatprep.subr.mxu0 0.0
      %325 = vmatpush1.msra.mxu0 %v218
      %326 = vmatprep.subr.mxu0 0.0
      %327 = vmatpush1.msra.mxu0 %v219
      %328 = vmatprep.subr.mxu0 0.0
      %329 = vmatpush1.msra.mxu0 %v220
      %330 = vmatprep.subr.mxu0 0.0
      %331 = vmatpush1.msra.mxu0 %v221
      %332 = vmatprep.subr.mxu0 0.0
      %333 = vmatpush1.msra.mxu0 %v222
      %334 = vmatprep.subr.mxu0 0.0
      %335 = vmatpush1.msra.mxu0 %v223
      %336 = vmatprep.subr.mxu0 0.0
      %337 = vmatpush1.msra.mxu0 %v224
      %338 = vmatprep.subr.mxu0 0.0
      %339 = vmatpush1.msra.mxu0 %v225
      %340 = vmatprep.subr.mxu0 0.0
      %341 = vmatpush1.msra.mxu0 %v226
      %342 = vmatprep.subr.mxu0 0.0
      %343 = vmatpush1.msra.mxu0 %v227
      %344 = vmatprep.subr.mxu0 0.0
      %345 = vmatpush1.msra.mxu0 %v228
      %346 = vmatprep.subr.mxu0 0.0
      %347 = vmatpush1.msra.mxu0 %v229
      %348 = vmatprep.subr.mxu0 0.0
      %349 = vmatpush1.msra.mxu0 %v230
      %350 = vmatprep.subr.mxu0 0.0
      %351 = vmatpush1.msra.mxu0 %v231
      %352 = vmatprep.subr.mxu0 0.0
      %353 = vmatpush1.msra.mxu0 %v232
      %354 = vmatprep.subr.mxu0 0.0
      %355 = vmatpush1.msra.mxu0 %v233
      %356 = vmatprep.subr.mxu0 0.0
      %357 = vmatpush1.msra.mxu0 0.0
      %358 = vmatprep.subr.mxu0 0.0
      %359 = vmatpush1.msra.mxu0 0.0
      %360 = vmatprep.subr.mxu0 0.0
      %361 = vmatpush1.msra.mxu0 0.0
      %362 = vmatprep.subr.mxu0 0.0
      %363 = vmatpush1.msra.mxu0 0.0
      %364 = vmatprep.subr.mxu0 0.0
      %365 = vmatpush1.msra.mxu0 0.0
      %366 = vmatprep.subr.mxu0 0.0
      %367 = vmatpush1.msra.mxu0 0.0
      %368 = vmatprep.subr.mxu0 0.0
      %369 = vmatpush1.msra.mxu0 0.0
      %370 = vmatprep.subr.mxu0 0.0
      %371 = vmatpush1.msra.mxu0 0.0
      %372 = vmatprep.subr.mxu0 0.0
      %373 = vmatpush1.msra.mxu0 0.0
      %374 = vmatprep.subr.mxu0 0.0
      %375 = vmatpush1.msra.mxu0 0.0
      %376 = vmatprep.subr.mxu0 0.0
      %377 = vmatpush1.msra.mxu0 0.0
      %378 = vmatprep.subr.mxu0 0.0
      %379 = vmatpush1.msra.mxu0 0.0
      %380 = vmatprep.subr.mxu0 0.0
      %381 = vmatpush1.msra.mxu0 0.0
      %382 = vmatprep.subr.mxu0 0.0
      %383 = vmatpush1.msra.mxu0 0.0
      %384 = vmatprep.subr.mxu0 0.0
      %385 = vmatpush1.msra.mxu0 0.0
      %386 = vmatprep.subr.mxu0 0.0
      %387 = vmatpush1.msra.mxu0 0.0
      %388 = vmatprep.mubr.f32.mxu0 0.0
      %389 = vmatmul.mubr.f32.gmra.mrb[0].mxu0 %v309
      %v390 = vpop.f32.mrb[0].mxu0
      %v391 = vadd.f32 0.0, %v390
      %v392 = vpop.f32.mrb[0].mxu0
      %393 = vmatprep.mubr.f32.mxu0 0.0
      %394 = vmatmul.mubr.f32.gmra.mrb[0].mxu0 %v311
      %v395 = vpop.f32.mrb[0].mxu0
      %v396 = vadd.f32 0.0, %v395
      %v397 = vpop.f32.mrb[0].mxu0
      %398 = vmatprep.mubr.f32.mxu0 0.0
      %399 = vmatmul.mubr.f32.gmra.mrb[0].mxu0 %v313
      %v400 = vpop.f32.mrb[0].mxu0
      %v401 = vadd.f32 0.0, %v400
      %v402 = vpop.f32.mrb[0].mxu0
      %403 = vmatprep.mubr.f32.mxu0 0.0
      %404 = vmatmul.mubr.f32.gmra.mrb[0].mxu0 %v315
      %v405 = vpop.f32.mrb[0].mxu0
      %v406 = vadd.f32 0.0, %v405
      %v407 = vpop.f32.mrb[0].mxu0
      %408 = vdwg.mxu0
      %v409 = vrcp.pop %v317
      %v410 = vmul.f32 1.0, %v409
      %v411 = vrcp.pop %v319
      %v412 = vmul.f32 1.0, %v411
      %v413 = vrcp.pop %v321
      %v414 = vmul.f32 1.0, %v413
      %v415 = vrcp.pop %v323
      %v416 = vmul.f32 1.0, %v415
      %v417 = vmul.f32 %v391, %v410
      %v418 = vmul.f32 %v396, %v412
      %v419 = vmul.f32 %v401, %v414
      %v420 = vmul.f32 %v406, %v416
      %vm421 = vcmask 130048
      %422 = vst.msk [vmem:[%s216] sm:$0xff] %vm421, %v417
      %423 = vst.msk [vmem:[%s216 + $0x8] sm:$0xff] %vm421, %v418
      %424 = vst.msk [vmem:[%s216 + $0x10] sm:$0xff] %vm421, %v419
      %425 = vst.msk [vmem:[%s216 + $0x18] sm:$0xff] %vm421, %v420
      %426 = vset.pattern.permute.xlu0 1
      %427 = vperm.xlu0 %426, %v235
      %v428 = vpop.permute.xlu0 %427
      %430 = vset.pattern.permute.xlu0 1
      %431 = vperm.xlu0 %430, %v236
      %v432 = vpop.permute.xlu0 %431
      %434 = vset.pattern.permute.xlu0 1
      %435 = vperm.xlu0 %434, %v237
      %v436 = vpop.permute.xlu0 %435
      %438 = vset.pattern.permute.xlu0 1
      %439 = vperm.xlu0 %438, %v238
      %v440 = vpop.permute.xlu0 %439
      %v442 = vlaneseq
      %v443 = vshrl.u32 %v442, 7
      %v444 = vsub.s32 1, %v443
      %v445 = vrot.slane %v234, %v444
      %v446 = vadd.f32 %v428, %v445
      %v447 = vadd.f32 %v432, %v445
      %v448 = vadd.f32 %v436, %v445
      %v449 = vadd.f32 %v440, %v445
      %vm450 = vcmp.ge.f32.partialorder %v446, 0.0
      %vm451 = vcmp.ge.f32.partialorder %v447, 0.0
      %vm452 = vcmp.ge.f32.partialorder %v448, 0.0
      %vm453 = vcmp.ge.f32.partialorder %v449, 0.0
      %v454 = vmul.f32 %v446, 0.2
      %v455 = vmul.f32 %v447, 0.2
      %v456 = vmul.f32 %v448, 0.2
      %v457 = vmul.f32 %v449, 0.2
      %v458 = vsel %vm450, %v446, %v454
      %v459 = vsel %vm451, %v447, %v455
      %v460 = vsel %vm452, %v448, %v456
      %v461 = vsel %vm453, %v449, %v457
      %v462 = vsel %vm248, %v458, -inf
      %v463 = vsel %vm249, %v459, -inf
      %v464 = vsel %vm250, %v460, -inf
      %v465 = vsel %vm251, %v461, -inf
      %466 = vmax.xlane.f32.xlu0 %v462
      %v467 = vpop.xlane.xlu0 %466
      %468 = vmax.xlane.f32.xlu0 %v463
      %v469 = vpop.xlane.xlu0 %468
      %470 = vmax.xlane.f32.xlu0 %v464
      %v471 = vpop.xlane.xlu0 %470
      %472 = vmax.xlane.f32.xlu0 %v465
      %v473 = vpop.xlane.xlu0 %472
      %v474 = vsub.f32 %v462, %v467
      %v475 = vsub.f32 %v463, %v469
      %v476 = vsub.f32 %v464, %v471
      %v477 = vsub.f32 %v465, %v473
      %v478 = vmul.f32 %v474, 1.442695
      %v479 = vpow.pop %v478
      %v480 = vmul.f32 %v475, 1.442695
      %v481 = vpow.pop %v480
      %v482 = vmul.f32 %v476, 1.442695
      %v483 = vpow.pop %v482
      %v484 = vmul.f32 %v477, 1.442695
      %v485 = vpow.pop %v484
      %486 = vadd.xlane.f32.xlu0 %v479
      %v487 = vpop.xlane.xlu0 %486
      %488 = vadd.xlane.f32.xlu0 %v481
      %v489 = vpop.xlane.xlu0 %488
      %490 = vadd.xlane.f32.xlu0 %v483
      %v491 = vpop.xlane.xlu0 %490
      %492 = vadd.xlane.f32.xlu0 %v485
      %v493 = vpop.xlane.xlu0 %492
      %510 = vrot.lane.b32.xlu0 %v218, 112
      %v511 = vpop.permute.xlu0 %510
      %512 = vrot.lane.b32.xlu0 %v219, 112
      %v513 = vpop.permute.xlu0 %512
      %514 = vrot.lane.b32.xlu0 %v220, 112
      %v515 = vpop.permute.xlu0 %514
      %516 = vrot.lane.b32.xlu0 %v221, 112
      %v517 = vpop.permute.xlu0 %516
      %518 = vrot.lane.b32.xlu0 %v222, 112
      %v519 = vpop.permute.xlu0 %518
      %520 = vrot.lane.b32.xlu0 %v223, 112
      %v521 = vpop.permute.xlu0 %520
      %522 = vrot.lane.b32.xlu0 %v224, 112
      %v523 = vpop.permute.xlu0 %522
      %524 = vrot.lane.b32.xlu0 %v225, 112
      %v525 = vpop.permute.xlu0 %524
      %526 = vrot.lane.b32.xlu0 %v226, 112
      %v527 = vpop.permute.xlu0 %526
      %528 = vrot.lane.b32.xlu0 %v227, 112
      %v529 = vpop.permute.xlu0 %528
      %530 = vrot.lane.b32.xlu0 %v228, 112
      %v531 = vpop.permute.xlu0 %530
      %532 = vrot.lane.b32.xlu0 %v229, 112
      %v533 = vpop.permute.xlu0 %532
      %534 = vrot.lane.b32.xlu0 %v230, 112
      %v535 = vpop.permute.xlu0 %534
      %536 = vrot.lane.b32.xlu0 %v231, 112
      %v537 = vpop.permute.xlu0 %536
      %538 = vrot.lane.b32.xlu0 %v232, 112
      %v539 = vpop.permute.xlu0 %538
      %540 = vrot.lane.b32.xlu0 %v233, 112
      %v541 = vpop.permute.xlu0 %540
      %558 = vmatprep.subr.mxu0 0.0
      %559 = vmatpush1.msra.mxu0 %v511
      %560 = vmatprep.subr.mxu0 0.0
      %561 = vmatpush1.msra.mxu0 %v513
      %562 = vmatprep.subr.mxu0 0.0
      %563 = vmatpush1.msra.mxu0 %v515
      %564 = vmatprep.subr.mxu0 0.0
      %565 = vmatpush1.msra.mxu0 %v517
      %566 = vmatprep.subr.mxu0 0.0
      %567 = vmatpush1.msra.mxu0 %v519
      %568 = vmatprep.subr.mxu0 0.0
      %569 = vmatpush1.msra.mxu0 %v521
      %570 = vmatprep.subr.mxu0 0.0
      %571 = vmatpush1.msra.mxu0 %v523
      %572 = vmatprep.subr.mxu0 0.0
      %573 = vmatpush1.msra.mxu0 %v525
      %574 = vmatprep.subr.mxu0 0.0
      %575 = vmatpush1.msra.mxu0 %v527
      %576 = vmatprep.subr.mxu0 0.0
      %577 = vmatpush1.msra.mxu0 %v529
      %578 = vmatprep.subr.mxu0 0.0
      %579 = vmatpush1.msra.mxu0 %v531
      %580 = vmatprep.subr.mxu0 0.0
      %581 = vmatpush1.msra.mxu0 %v533
      %582 = vmatprep.subr.mxu0 0.0
      %583 = vmatpush1.msra.mxu0 %v535
      %584 = vmatprep.subr.mxu0 0.0
      %585 = vmatpush1.msra.mxu0 %v537
      %586 = vmatprep.subr.mxu0 0.0
      %587 = vmatpush1.msra.mxu0 %v539
      %588 = vmatprep.subr.mxu0 0.0
      %589 = vmatpush1.msra.mxu0 %v541
      %590 = vmatprep.subr.mxu0 0.0
      %591 = vmatpush1.msra.mxu0 0.0
      %592 = vmatprep.subr.mxu0 0.0
      %593 = vmatpush1.msra.mxu0 0.0
      %594 = vmatprep.subr.mxu0 0.0
      %595 = vmatpush1.msra.mxu0 0.0
      %596 = vmatprep.subr.mxu0 0.0
      %597 = vmatpush1.msra.mxu0 0.0
      %598 = vmatprep.subr.mxu0 0.0
      %599 = vmatpush1.msra.mxu0 0.0
      %600 = vmatprep.subr.mxu0 0.0
      %601 = vmatpush1.msra.mxu0 0.0
      %602 = vmatprep.subr.mxu0 0.0
      %603 = vmatpush1.msra.mxu0 0.0
      %604 = vmatprep.subr.mxu0 0.0
      %605 = vmatpush1.msra.mxu0 0.0
      %606 = vmatprep.subr.mxu0 0.0
      %607 = vmatpush1.msra.mxu0 0.0
      %608 = vmatprep.subr.mxu0 0.0
      %609 = vmatpush1.msra.mxu0 0.0
      %610 = vmatprep.subr.mxu0 0.0
      %611 = vmatpush1.msra.mxu0 0.0
      %612 = vmatprep.subr.mxu0 0.0
      %613 = vmatpush1.msra.mxu0 0.0
      %614 = vmatprep.subr.mxu0 0.0
      %615 = vmatpush1.msra.mxu0 0.0
      %616 = vmatprep.subr.mxu0 0.0
      %617 = vmatpush1.msra.mxu0 0.0
      %618 = vmatprep.subr.mxu0 0.0
      %619 = vmatpush1.msra.mxu0 0.0
      %620 = vmatprep.subr.mxu0 0.0
      %621 = vmatpush1.msra.mxu0 0.0
      %622 = vmatprep.mubr.f32.mxu0 0.0
      %623 = vmatmul.mubr.f32.gmra.mrb[0].mxu0 %v479
      %v624 = vpop.f32.mrb[0].mxu0
      %v625 = vadd.f32 0.0, %v624
      %v626 = vpop.f32.mrb[0].mxu0
      %627 = vmatprep.mubr.f32.mxu0 0.0
      %628 = vmatmul.mubr.f32.gmra.mrb[0].mxu0 %v481
      %v629 = vpop.f32.mrb[0].mxu0
      %v630 = vadd.f32 0.0, %v629
      %v631 = vpop.f32.mrb[0].mxu0
      %632 = vmatprep.mubr.f32.mxu0 0.0
      %633 = vmatmul.mubr.f32.gmra.mrb[0].mxu0 %v483
      %v634 = vpop.f32.mrb[0].mxu0
      %v635 = vadd.f32 0.0, %v634
      %v636 = vpop.f32.mrb[0].mxu0
      %637 = vmatprep.mubr.f32.mxu0 0.0
      %638 = vmatmul.mubr.f32.gmra.mrb[0].mxu0 %v485
      %v639 = vpop.f32.mrb[0].mxu0
      %v640 = vadd.f32 0.0, %v639
      %v641 = vpop.f32.mrb[0].mxu0
      %642 = vdwg.mxu0
      %v643 = vrcp.pop %v487
      %v644 = vmul.f32 1.0, %v643
      %v645 = vrcp.pop %v489
      %v646 = vmul.f32 1.0, %v645
      %v647 = vrcp.pop %v491
      %v648 = vmul.f32 1.0, %v647
      %v649 = vrcp.pop %v493
      %v650 = vmul.f32 1.0, %v649
      %v651 = vmul.f32 %v625, %v644
      %v652 = vmul.f32 %v630, %v646
      %v653 = vmul.f32 %v635, %v648
      %v654 = vmul.f32 %v640, %v650
      %659 = vrot.lane.b32.xlu0 %v651, 16
      %v660 = vpop.permute.xlu0 %659
      %661 = vrot.lane.b32.xlu0 %v652, 16
      %v662 = vpop.permute.xlu0 %661
      %663 = vrot.lane.b32.xlu0 %v653, 16
      %v664 = vpop.permute.xlu0 %663
      %665 = vrot.lane.b32.xlu0 %v654, 16
      %v666 = vpop.permute.xlu0 %665
      %vm671 = vcmask 261248
      %672 = vst.msk [vmem:[%s216] sm:$0xff] %vm671, %v660
      %673 = vst.msk [vmem:[%s216 + $0x8] sm:$0xff] %vm671, %v662
      %674 = vst.msk [vmem:[%s216 + $0x10] sm:$0xff] %vm671, %v664
      %675 = vst.msk [vmem:[%s216 + $0x18] sm:$0xff] %vm671, %v666
      %676 = vset.pattern.permute.xlu0 2
      %677 = vperm.xlu0 %676, %v235
      %v678 = vpop.permute.xlu0 %677
      %680 = vset.pattern.permute.xlu0 2
      %681 = vperm.xlu0 %680, %v236
      %v682 = vpop.permute.xlu0 %681
      %684 = vset.pattern.permute.xlu0 2
      %685 = vperm.xlu0 %684, %v237
      %v686 = vpop.permute.xlu0 %685
      %688 = vset.pattern.permute.xlu0 2
      %689 = vperm.xlu0 %688, %v238
      %v690 = vpop.permute.xlu0 %689
      %v692 = vlaneseq
      %v693 = vshrl.u32 %v692, 7
      %v694 = vsub.s32 2, %v693
      %v695 = vrot.slane %v234, %v694
      %v696 = vadd.f32 %v678, %v695
      %v697 = vadd.f32 %v682, %v695
      %v698 = vadd.f32 %v686, %v695
      %v699 = vadd.f32 %v690, %v695
      %vm700 = vcmp.ge.f32.partialorder %v696, 0.0
      %vm701 = vcmp.ge.f32.partialorder %v697, 0.0
      %vm702 = vcmp.ge.f32.partialorder %v698, 0.0
      %vm703 = vcmp.ge.f32.partialorder %v699, 0.0
      %v704 = vmul.f32 %v696, 0.2
      %v705 = vmul.f32 %v697, 0.2
      %v706 = vmul.f32 %v698, 0.2
      %v707 = vmul.f32 %v699, 0.2
      %v708 = vsel %vm700, %v696, %v704
      %v709 = vsel %vm701, %v697, %v705
      %v710 = vsel %vm702, %v698, %v706
      %v711 = vsel %vm703, %v699, %v707
      %v712 = vsel %vm248, %v708, -inf
      %v713 = vsel %vm249, %v709, -inf
      %v714 = vsel %vm250, %v710, -inf
      %v715 = vsel %vm251, %v711, -inf
      %716 = vmax.xlane.f32.xlu0 %v712
      %v717 = vpop.xlane.xlu0 %716
      %718 = vmax.xlane.f32.xlu0 %v713
      %v719 = vpop.xlane.xlu0 %718
      %720 = vmax.xlane.f32.xlu0 %v714
      %v721 = vpop.xlane.xlu0 %720
      %722 = vmax.xlane.f32.xlu0 %v715
      %v723 = vpop.xlane.xlu0 %722
      %v724 = vsub.f32 %v712, %v717
      %v725 = vsub.f32 %v713, %v719
      %v726 = vsub.f32 %v714, %v721
      %v727 = vsub.f32 %v715, %v723
      %v728 = vmul.f32 %v724, 1.442695
      %v729 = vpow.pop %v728
      %v730 = vmul.f32 %v725, 1.442695
      %v731 = vpow.pop %v730
      %v732 = vmul.f32 %v726, 1.442695
      %v733 = vpow.pop %v732
      %v734 = vmul.f32 %v727, 1.442695
      %v735 = vpow.pop %v734
      %736 = vadd.xlane.f32.xlu0 %v729
      %v737 = vpop.xlane.xlu0 %736
      %738 = vadd.xlane.f32.xlu0 %v731
      %v739 = vpop.xlane.xlu0 %738
      %740 = vadd.xlane.f32.xlu0 %v733
      %v741 = vpop.xlane.xlu0 %740
      %742 = vadd.xlane.f32.xlu0 %v735
      %v743 = vpop.xlane.xlu0 %742
      %744 = vrot.lane.b32.xlu0 %v218, 96
      %v745 = vpop.permute.xlu0 %744
      %746 = vrot.lane.b32.xlu0 %v219, 96
      %v747 = vpop.permute.xlu0 %746
      %748 = vrot.lane.b32.xlu0 %v220, 96
      %v749 = vpop.permute.xlu0 %748
      %750 = vrot.lane.b32.xlu0 %v221, 96
      %v751 = vpop.permute.xlu0 %750
      %752 = vrot.lane.b32.xlu0 %v222, 96
      %v753 = vpop.permute.xlu0 %752
      %754 = vrot.lane.b32.xlu0 %v223, 96
      %v755 = vpop.permute.xlu0 %754
      %756 = vrot.lane.b32.xlu0 %v224, 96
      %v757 = vpop.permute.xlu0 %756
      %758 = vrot.lane.b32.xlu0 %v225, 96
      %v759 = vpop.permute.xlu0 %758
      %760 = vrot.lane.b32.xlu0 %v226, 96
      %v761 = vpop.permute.xlu0 %760
      %762 = vrot.lane.b32.xlu0 %v227, 96
      %v763 = vpop.permute.xlu0 %762
      %764 = vrot.lane.b32.xlu0 %v228, 96
      %v765 = vpop.permute.xlu0 %764
      %766 = vrot.lane.b32.xlu0 %v229, 96
      %v767 = vpop.permute.xlu0 %766
      %768 = vrot.lane.b32.xlu0 %v230, 96
      %v769 = vpop.permute.xlu0 %768
      %770 = vrot.lane.b32.xlu0 %v231, 96
      %v771 = vpop.permute.xlu0 %770
      %772 = vrot.lane.b32.xlu0 %v232, 96
      %v773 = vpop.permute.xlu0 %772
      %774 = vrot.lane.b32.xlu0 %v233, 96
      %v775 = vpop.permute.xlu0 %774
      %792 = vmatprep.subr.mxu0 0.0
      %793 = vmatpush1.msra.mxu0 %v745
      %794 = vmatprep.subr.mxu0 0.0
      %795 = vmatpush1.msra.mxu0 %v747
      %796 = vmatprep.subr.mxu0 0.0
      %797 = vmatpush1.msra.mxu0 %v749
      %798 = vmatprep.subr.mxu0 0.0
      %799 = vmatpush1.msra.mxu0 %v751
      %800 = vmatprep.subr.mxu0 0.0
      %801 = vmatpush1.msra.mxu0 %v753
      %802 = vmatprep.subr.mxu0 0.0
      %803 = vmatpush1.msra.mxu0 %v755
      %804 = vmatprep.subr.mxu0 0.0
      %805 = vmatpush1.msra.mxu0 %v757
      %806 = vmatprep.subr.mxu0 0.0
      %807 = vmatpush1.msra.mxu0 %v759
      %808 = vmatprep.subr.mxu0 0.0
      %809 = vmatpush1.msra.mxu0 %v761
      %810 = vmatprep.subr.mxu0 0.0
      %811 = vmatpush1.msra.mxu0 %v763
      %812 = vmatprep.subr.mxu0 0.0
      %813 = vmatpush1.msra.mxu0 %v765
      %814 = vmatprep.subr.mxu0 0.0
      %815 = vmatpush1.msra.mxu0 %v767
      %816 = vmatprep.subr.mxu0 0.0
      %817 = vmatpush1.msra.mxu0 %v769
      %818 = vmatprep.subr.mxu0 0.0
      %819 = vmatpush1.msra.mxu0 %v771
      %820 = vmatprep.subr.mxu0 0.0
      %821 = vmatpush1.msra.mxu0 %v773
      %822 = vmatprep.subr.mxu0 0.0
      %823 = vmatpush1.msra.mxu0 %v775
      %824 = vmatprep.subr.mxu0 0.0
      %825 = vmatpush1.msra.mxu0 0.0
      %826 = vmatprep.subr.mxu0 0.0
      %827 = vmatpush1.msra.mxu0 0.0
      %828 = vmatprep.subr.mxu0 0.0
      %829 = vmatpush1.msra.mxu0 0.0
      %830 = vmatprep.subr.mxu0 0.0
      %831 = vmatpush1.msra.mxu0 0.0
      %832 = vmatprep.subr.mxu0 0.0
      %833 = vmatpush1.msra.mxu0 0.0
      %834 = vmatprep.subr.mxu0 0.0
      %835 = vmatpush1.msra.mxu0 0.0
      %836 = vmatprep.subr.mxu0 0.0
      %837 = vmatpush1.msra.mxu0 0.0
      %838 = vmatprep.subr.mxu0 0.0
      %839 = vmatpush1.msra.mxu0 0.0
      %840 = vmatprep.subr.mxu0 0.0
      %841 = vmatpush1.msra.mxu0 0.0
      %842 = vmatprep.subr.mxu0 0.0
      %843 = vmatpush1.msra.mxu0 0.0
      %844 = vmatprep.subr.mxu0 0.0
      %845 = vmatpush1.msra.mxu0 0.0
      %846 = vmatprep.subr.mxu0 0.0
      %847 = vmatpush1.msra.mxu0 0.0
      %848 = vmatprep.subr.mxu0 0.0
      %849 = vmatpush1.msra.mxu0 0.0
      %850 = vmatprep.subr.mxu0 0.0
      %851 = vmatpush1.msra.mxu0 0.0
      %852 = vmatprep.subr.mxu0 0.0
      %853 = vmatpush1.msra.mxu0 0.0
      %854 = vmatprep.subr.mxu0 0.0
      %855 = vmatpush1.msra.mxu0 0.0
      %856 = vmatprep.mubr.f32.mxu0 0.0
      %857 = vmatmul.mubr.f32.gmra.mrb[0].mxu0 %v729
      %v858 = vpop.f32.mrb[0].mxu0
      %v859 = vadd.f32 0.0, %v858
      %v860 = vpop.f32.mrb[0].mxu0
      %861 = vmatprep.mubr.f32.mxu0 0.0
      %862 = vmatmul.mubr.f32.gmra.mrb[0].mxu0 %v731
      %v863 = vpop.f32.mrb[0].mxu0
      %v864 = vadd.f32 0.0, %v863
      %v865 = vpop.f32.mrb[0].mxu0
      %866 = vmatprep.mubr.f32.mxu0 0.0
      %867 = vmatmul.mubr.f32.gmra.mrb[0].mxu0 %v733
      %v868 = vpop.f32.mrb[0].mxu0
      %v869 = vadd.f32 0.0, %v868
      %v870 = vpop.f32.mrb[0].mxu0
      %871 = vmatprep.mubr.f32.mxu0 0.0
      %872 = vmatmul.mubr.f32.gmra.mrb[0].mxu0 %v735
      %v873 = vpop.f32.mrb[0].mxu0
      %v874 = vadd.f32 0.0, %v873
      %v875 = vpop.f32.mrb[0].mxu0
      %876 = vdwg.mxu0
      %v877 = vrcp.pop %v737
      %v878 = vmul.f32 1.0, %v877
      %v879 = vrcp.pop %v739
      %v880 = vmul.f32 1.0, %v879
      %v881 = vrcp.pop %v741
      %v882 = vmul.f32 1.0, %v881
      %v883 = vrcp.pop %v743
      %v884 = vmul.f32 1.0, %v883
      %v885 = vmul.f32 %v859, %v878
      %v886 = vmul.f32 %v864, %v880
      %v887 = vmul.f32 %v869, %v882
      %v888 = vmul.f32 %v874, %v884
      %893 = vrot.lane.b32.xlu0 %v885, 32
      %v894 = vpop.permute.xlu0 %893
      %895 = vrot.lane.b32.xlu0 %v886, 32
      %v896 = vpop.permute.xlu0 %895
      %897 = vrot.lane.b32.xlu0 %v887, 32
      %v898 = vpop.permute.xlu0 %897
      %899 = vrot.lane.b32.xlu0 %v888, 32
      %v900 = vpop.permute.xlu0 %899
      %vm905 = vcmask 392448
      %906 = vst.msk [vmem:[%s216] sm:$0xff] %vm905, %v894
      %907 = vst.msk [vmem:[%s216 + $0x8] sm:$0xff] %vm905, %v896
      %908 = vst.msk [vmem:[%s216 + $0x10] sm:$0xff] %vm905, %v898
      %909 = vst.msk [vmem:[%s216 + $0x18] sm:$0xff] %vm905, %v900
      %910 = vset.pattern.permute.xlu0 3
      %911 = vperm.xlu0 %910, %v235
      %v912 = vpop.permute.xlu0 %911
      %914 = vset.pattern.permute.xlu0 3
      %915 = vperm.xlu0 %914, %v236
      %v916 = vpop.permute.xlu0 %915
      %918 = vset.pattern.permute.xlu0 3
      %919 = vperm.xlu0 %918, %v237
      %v920 = vpop.permute.xlu0 %919
      %922 = vset.pattern.permute.xlu0 3
      %923 = vperm.xlu0 %922, %v238
      %v924 = vpop.permute.xlu0 %923
      %v926 = vlaneseq
      %v927 = vshrl.u32 %v926, 7
      %v928 = vsub.s32 3, %v927
      %v929 = vrot.slane %v234, %v928
      %v930 = vadd.f32 %v912, %v929
      %v931 = vadd.f32 %v916, %v929
      %v932 = vadd.f32 %v920, %v929
      %v933 = vadd.f32 %v924, %v929
      %vm934 = vcmp.ge.f32.partialorder %v930, 0.0
      %vm935 = vcmp.ge.f32.partialorder %v931, 0.0
      %vm936 = vcmp.ge.f32.partialorder %v932, 0.0
      %vm937 = vcmp.ge.f32.partialorder %v933, 0.0
      %v938 = vmul.f32 %v930, 0.2
      %v939 = vmul.f32 %v931, 0.2
      %v940 = vmul.f32 %v932, 0.2
      %v941 = vmul.f32 %v933, 0.2
      %v942 = vsel %vm934, %v930, %v938
      %v943 = vsel %vm935, %v931, %v939
      %v944 = vsel %vm936, %v932, %v940
      %v945 = vsel %vm937, %v933, %v941
      %v946 = vsel %vm248, %v942, -inf
      %v947 = vsel %vm249, %v943, -inf
      %v948 = vsel %vm250, %v944, -inf
      %v949 = vsel %vm251, %v945, -inf
      %950 = vmax.xlane.f32.xlu0 %v946
      %v951 = vpop.xlane.xlu0 %950
      %952 = vmax.xlane.f32.xlu0 %v947
      %v953 = vpop.xlane.xlu0 %952
      %954 = vmax.xlane.f32.xlu0 %v948
      %v955 = vpop.xlane.xlu0 %954
      %956 = vmax.xlane.f32.xlu0 %v949
      %v957 = vpop.xlane.xlu0 %956
      %v958 = vsub.f32 %v946, %v951
      %v959 = vsub.f32 %v947, %v953
      %v960 = vsub.f32 %v948, %v955
      %v961 = vsub.f32 %v949, %v957
      %v962 = vmul.f32 %v958, 1.442695
      %v963 = vpow.pop %v962
      %v964 = vmul.f32 %v959, 1.442695
      %v965 = vpow.pop %v964
      %v966 = vmul.f32 %v960, 1.442695
      %v967 = vpow.pop %v966
      %v968 = vmul.f32 %v961, 1.442695
      %v969 = vpow.pop %v968
      %970 = vadd.xlane.f32.xlu0 %v963
      %v971 = vpop.xlane.xlu0 %970
      %972 = vadd.xlane.f32.xlu0 %v965
      %v973 = vpop.xlane.xlu0 %972
      %974 = vadd.xlane.f32.xlu0 %v967
      %v975 = vpop.xlane.xlu0 %974
      %976 = vadd.xlane.f32.xlu0 %v969
      %v977 = vpop.xlane.xlu0 %976
      %978 = vrot.lane.b32.xlu0 %v218, 80
      %v979 = vpop.permute.xlu0 %978
      %980 = vrot.lane.b32.xlu0 %v219, 80
      %v981 = vpop.permute.xlu0 %980
      %982 = vrot.lane.b32.xlu0 %v220, 80
      %v983 = vpop.permute.xlu0 %982
      %984 = vrot.lane.b32.xlu0 %v221, 80
      %v985 = vpop.permute.xlu0 %984
      %986 = vrot.lane.b32.xlu0 %v222, 80
      %v987 = vpop.permute.xlu0 %986
      %988 = vrot.lane.b32.xlu0 %v223, 80
      %v989 = vpop.permute.xlu0 %988
      %990 = vrot.lane.b32.xlu0 %v224, 80
      %v991 = vpop.permute.xlu0 %990
      %992 = vrot.lane.b32.xlu0 %v225, 80
      %v993 = vpop.permute.xlu0 %992
      %994 = vrot.lane.b32.xlu0 %v226, 80
      %v995 = vpop.permute.xlu0 %994
      %996 = vrot.lane.b32.xlu0 %v227, 80
      %v997 = vpop.permute.xlu0 %996
      %998 = vrot.lane.b32.xlu0 %v228, 80
      %v999 = vpop.permute.xlu0 %998
      %1000 = vrot.lane.b32.xlu0 %v229, 80
      %v1001 = vpop.permute.xlu0 %1000
      %1002 = vrot.lane.b32.xlu0 %v230, 80
      %v1003 = vpop.permute.xlu0 %1002
      %1004 = vrot.lane.b32.xlu0 %v231, 80
      %v1005 = vpop.permute.xlu0 %1004
      %1006 = vrot.lane.b32.xlu0 %v232, 80
      %v1007 = vpop.permute.xlu0 %1006
      %1008 = vrot.lane.b32.xlu0 %v233, 80
      %v1009 = vpop.permute.xlu0 %1008
      %1026 = vmatprep.subr.mxu0 0.0
      %1027 = vmatpush1.msra.mxu0 %v979
      %1028 = vmatprep.subr.mxu0 0.0
      %1029 = vmatpush1.msra.mxu0 %v981
      %1030 = vmatprep.subr.mxu0 0.0
      %1031 = vmatpush1.msra.mxu0 %v983
      %1032 = vmatprep.subr.mxu0 0.0
      %1033 = vmatpush1.msra.mxu0 %v985
      %1034 = vmatprep.subr.mxu0 0.0
      %1035 = vmatpush1.msra.mxu0 %v987
      %1036 = vmatprep.subr.mxu0 0.0
      %1037 = vmatpush1.msra.mxu0 %v989
      %1038 = vmatprep.subr.mxu0 0.0
      %1039 = vmatpush1.msra.mxu0 %v991
      %1040 = vmatprep.subr.mxu0 0.0
      %1041 = vmatpush1.msra.mxu0 %v993
      %1042 = vmatprep.subr.mxu0 0.0
      %1043 = vmatpush1.msra.mxu0 %v995
      %1044 = vmatprep.subr.mxu0 0.0
      %1045 = vmatpush1.msra.mxu0 %v997
      %1046 = vmatprep.subr.mxu0 0.0
      %1047 = vmatpush1.msra.mxu0 %v999
      %1048 = vmatprep.subr.mxu0 0.0
      %1049 = vmatpush1.msra.mxu0 %v1001
      %1050 = vmatprep.subr.mxu0 0.0
      %1051 = vmatpush1.msra.mxu0 %v1003
      %1052 = vmatprep.subr.mxu0 0.0
      %1053 = vmatpush1.msra.mxu0 %v1005
      %1054 = vmatprep.subr.mxu0 0.0
      %1055 = vmatpush1.msra.mxu0 %v1007
      %1056 = vmatprep.subr.mxu0 0.0
      %1057 = vmatpush1.msra.mxu0 %v1009
      %1058 = vmatprep.subr.mxu0 0.0
      %1059 = vmatpush1.msra.mxu0 0.0
      %1060 = vmatprep.subr.mxu0 0.0
      %1061 = vmatpush1.msra.mxu0 0.0
      %1062 = vmatprep.subr.mxu0 0.0
      %1063 = vmatpush1.msra.mxu0 0.0
      %1064 = vmatprep.subr.mxu0 0.0
      %1065 = vmatpush1.msra.mxu0 0.0
      %1066 = vmatprep.subr.mxu0 0.0
      %1067 = vmatpush1.msra.mxu0 0.0
      %1068 = vmatprep.subr.mxu0 0.0
      %1069 = vmatpush1.msra.mxu0 0.0
      %1070 = vmatprep.subr.mxu0 0.0
      %1071 = vmatpush1.msra.mxu0 0.0
      %1072 = vmatprep.subr.mxu0 0.0
      %1073 = vmatpush1.msra.mxu0 0.0
      %1074 = vmatprep.subr.mxu0 0.0
      %1075 = vmatpush1.msra.mxu0 0.0
      %1076 = vmatprep.subr.mxu0 0.0
      %1077 = vmatpush1.msra.mxu0 0.0
      %1078 = vmatprep.subr.mxu0 0.0
      %1079 = vmatpush1.msra.mxu0 0.0
      %1080 = vmatprep.subr.mxu0 0.0
      %1081 = vmatpush1.msra.mxu0 0.0
      %1082 = vmatprep.subr.mxu0 0.0
      %1083 = vmatpush1.msra.mxu0 0.0
      %1084 = vmatprep.subr.mxu0 0.0
      %1085 = vmatpush1.msra.mxu0 0.0
      %1086 = vmatprep.subr.mxu0 0.0
      %1087 = vmatpush1.msra.mxu0 0.0
      %1088 = vmatprep.subr.mxu0 0.0
      %1089 = vmatpush1.msra.mxu0 0.0
      %1090 = vmatprep.mubr.f32.mxu0 0.0
      %1091 = vmatmul.mubr.f32.gmra.mrb[0].mxu0 %v963
      %v1092 = vpop.f32.mrb[0].mxu0
      %v1093 = vadd.f32 0.0, %v1092
      %v1094 = vpop.f32.mrb[0].mxu0
      %1095 = vmatprep.mubr.f32.mxu0 0.0
      %1096 = vmatmul.mubr.f32.gmra.mrb[0].mxu0 %v965
      %v1097 = vpop.f32.mrb[0].mxu0
      %v1098 = vadd.f32 0.0, %v1097
      %v1099 = vpop.f32.mrb[0].mxu0
      %1100 = vmatprep.mubr.f32.mxu0 0.0
      %1101 = vmatmul.mubr.f32.gmra.mrb[0].mxu0 %v967
      %v1102 = vpop.f32.mrb[0].mxu0
      %v1103 = vadd.f32 0.0, %v1102
      %v1104 = vpop.f32.mrb[0].mxu0
      %1105 = vmatprep.mubr.f32.mxu0 0.0
      %1106 = vmatmul.mubr.f32.gmra.mrb[0].mxu0 %v969
      %v1107 = vpop.f32.mrb[0].mxu0
      %v1108 = vadd.f32 0.0, %v1107
      %v1109 = vpop.f32.mrb[0].mxu0
      %1110 = vdwg.mxu0
      %v1111 = vrcp.pop %v971
      %v1112 = vmul.f32 1.0, %v1111
      %v1113 = vrcp.pop %v973
      %v1114 = vmul.f32 1.0, %v1113
      %v1115 = vrcp.pop %v975
      %v1116 = vmul.f32 1.0, %v1115
      %v1117 = vrcp.pop %v977
      %v1118 = vmul.f32 1.0, %v1117
      %v1119 = vmul.f32 %v1093, %v1112
      %v1120 = vmul.f32 %v1098, %v1114
      %v1121 = vmul.f32 %v1103, %v1116
      %v1122 = vmul.f32 %v1108, %v1118
      %1127 = vrot.lane.b32.xlu0 %v1119, 48
      %v1128 = vpop.permute.xlu0 %1127
      %1129 = vrot.lane.b32.xlu0 %v1120, 48
      %v1130 = vpop.permute.xlu0 %1129
      %1131 = vrot.lane.b32.xlu0 %v1121, 48
      %v1132 = vpop.permute.xlu0 %1131
      %1133 = vrot.lane.b32.xlu0 %v1122, 48
      %v1134 = vpop.permute.xlu0 %1133
      %vm1139 = vcmask 523648
      %1140 = vst.msk [vmem:[%s216] sm:$0xff] %vm1139, %v1128
      %1141 = vst.msk [vmem:[%s216 + $0x8] sm:$0xff] %vm1139, %v1130
      %1142 = vst.msk [vmem:[%s216 + $0x10] sm:$0xff] %vm1139, %v1132
      %1143 = vst.msk [vmem:[%s216 + $0x18] sm:$0xff] %vm1139, %v1134
      %s1144 = smul.u32 4, %s15
      %p1145 = scmp.lt.s32.totalorder %s1144, 15
      %s1146 = scalar_select %p1145, %s1144, 15
      %s1147 = smul.addr %s1146, 8
      %s1148 = scalar_lea.vmem %s4, %s1147
      // Predicated region
      $region37: #{tpu_custom_call.1} parent=35 // pred_check
        %p1149 = pneg %p127
      $region38: #{tpu_custom_call.1} parent=35 // pred_check_branch
        %1151 = sbr.rel (%p1149) target = $region40
      $region39: #{tpu_custom_call.1} parent=35 // pred_region
        %s1152 = smul.u32 4, %s15
      $region40: #{tpu_custom_call.1} parent=35 // pred_fallthru
        _
    $region36: #{tpu_custom_call.1} parent=5 // pred_fallthru
      _
    %p1153 = scmp.le.s32.totalorder 2, %s10
    // Predicated region
    $region41: #{tpu_custom_call.1} parent=5 // pred_check
      %p1154 = pneg %p1153
    $region42: #{tpu_custom_call.1} parent=5 // pred_check_branch
      %1156 = sbr.rel (%p1154) target = $region44
    $region43: #{tpu_custom_call.1} parent=5 // pred_region
      %s1157 = ssub.s32 %s10, 2
      // Predicated region
      $region45: #{tpu_custom_call.1} parent=43 // pred_check
        %p1158 = pneg %p133
      $region46: #{tpu_custom_call.1} parent=43 // pred_check_branch
        %1160 = sbr.rel (%p1158) target = $region48
      $region47: #{tpu_custom_call.1} parent=43 // pred_region
        %s1161 = smul.u32 4, %s16
        %p1162 = scmp.lt.s32.totalorder %s1161, 15
        %s1163 = scalar_select %p1162, %s1161, 15
        %s1164 = smul.addr %s1163, 8
        %s1165 = scalar_lea.vmem %s4, %s1164
      $region48: #{tpu_custom_call.1} parent=43 // pred_fallthru
        _
    $region44: #{tpu_custom_call.1} parent=5 // pred_fallthru
      _
  $region6: #{tpu_custom_call.1} parent=0 // loop_footer
    %s14 = sadd.s32 1, %s10
  $region7: #{tpu_custom_call.1} parent=0 // loop_footer_branch
    %9 = sbr.rel target = $region3
  $region8: #{tpu_custom_call.1} parent=0 // loop_exit
    _

</llo_original>
